<compile_context>
chip_gen: v7x
topology: tpu7x:2x2x1
jax: 0.10.0
libtpu: 0.0.40
codegen_flags: <defaults>
</compile_context>

<pallas_src>
import functools
import math

import jax
import jax.numpy as jnp
from jax.experimental import pallas as pl
from jax.experimental.pallas import tpu as pltpu


# ------------------------------ helpers --------------------------------------
def _round_up(x, m):
    return ((x + m - 1) // m) * m


def _device_generation():
    """Best-effort TPU generation (4/5/6/7); None if unknown."""
    try:
        kind = jax.devices()[0].device_kind.lower()
    except Exception:
        return None
    if "tpu7" in kind or "v7" in kind:
        return 7
    for gen in (6, 5, 4):
        if f"v{gen}" in kind:
            return gen
    return None


# ----------------------------- Pallas LM head --------------------------------
def _lm_head_kernel_tiled(h_ref, w_ref, o_ref):
    """h_ref: (tm, H) bf16, w_ref: (tn, H) bf16, o_ref: (tm, tn)."""
    o_ref[...] = jax.lax.dot_general(
        h_ref[...],
        w_ref[...],
        dimension_numbers=(((1,), (1,)), ((), ())),   # contract on H
        preferred_element_type=jnp.float32,           # f32 MXU accumulation
    ).astype(o_ref.dtype)


def _lm_head_kernel_resident(h_ref, w_ref, o_ref, *, tm):
    """h_ref: (M_pad, H) bf16 VMEM-resident; rows sliced per inner M step."""
    i = pl.program_id(1)
    row0 = pl.multiple_of(i * tm, tm)
    h = h_ref[pl.ds(row0, tm), :]
    o_ref[...] = jax.lax.dot_general(
        h,
        w_ref[...],
        dimension_numbers=(((1,), (1,)), ((), ())),
        preferred_element_type=jnp.float32,
    ).astype(o_ref.dtype)


def lm_head(hidden, emb_table, *, tm=None, tn=None, out_dtype=jnp.bfloat16):
    """hidden: [M, H], emb_table: [V, H]  ->  logits [M, V] (tied weights)."""
    M, H = hidden.shape
    V, H2 = emb_table.shape
    assert H == H2

    # bf16 operands for the MXU (no-op casts if already bf16).
    h = hidden if hidden.dtype == jnp.bfloat16 else hidden.astype(jnp.bfloat16)
    w = (emb_table if emb_table.dtype == jnp.bfloat16
         else emb_table.astype(jnp.bfloat16))

    gen = _device_generation()
    if gen in (4, 5, 6):
        # 128 MiB VMEM: big tiles + generous scoped-VMEM budget.
        vmem_budget = 100 * 1024 * 1024
        tm_d, tn_d = 512, 4096
    else:
        # v7x (64 MiB VMEM) or unknown: conservative.
        vmem_budget = 48 * 1024 * 1024
        tm_d, tn_d = 256, 2048
    if tm is None:
        tm = tm_d
    if tn is None:
        tn = tn_d

    # Clamp tiles for small problems; tm multiple of 16 (bf16 sublane pack),
    # tn multiple of 128 (lane width).
    tm = max(16, min(tm, _round_up(M, 16)))
    tn = max(128, min(tn, _round_up(V, 128)))
    nm = pl.cdiv(M, tm)
    nv = pl.cdiv(V, tn)
    M_pad = nm * tm

    out_bytes = jnp.dtype(out_dtype).itemsize
    # Conservative VMEM estimate (assume double-buffering on every operand).
    weight_buf = 2 * tn * H * 2
    out_buf = 2 * tm * tn * out_bytes
    resident_buf = 2 * M_pad * H * 2
    resident = (resident_buf + weight_buf + out_buf) <= vmem_budget

    cost = pl.CostEstimate(
        flops=2 * M * V * H,
        transcendentals=0,
        bytes_accessed=(M * H + V * H) * 2 + M * V * out_bytes,
    )
    compiler_params = pltpu.CompilerParams(
        # Only the OUTER V axis is megacore-sharded: each v7x core reads its
        # half of the table exactly once and keeps the weight tile resident
        # across its whole inner M loop.
        dimension_semantics=("parallel", "arbitrary"),
        vmem_limit_bytes=vmem_budget,
    )

    if resident:
        # Hidden stays in VMEM for the whole grid: one HBM read total.
        if M_pad != M:
            h = jnp.pad(h, ((0, M_pad - M), (0, 0)))
        kernel = functools.partial(_lm_head_kernel_resident, tm=tm)
        h_spec = pl.BlockSpec((M_pad, H), lambda j, i: (0, 0))
    else:
        # Fallback: stream (tm, H) hidden tiles.
        kernel = _lm_head_kernel_tiled
        h_spec = pl.BlockSpec((tm, H), lambda j, i: (i, 0))

    return pl.pallas_call(
        kernel,
        out_shape=jax.ShapeDtypeStruct((M, V), out_dtype),
        grid_spec=pltpu.PrefetchScalarGridSpec(
            num_scalar_prefetch=0,
            # V is the OUTER (slow) axis: each (tn, H) weight tile is DMA'd
            # from HBM exactly once and reused across all inner M steps.
            grid=(nv, nm),
            in_specs=[
                h_spec,                                      # hidden
                pl.BlockSpec((tn, H), lambda j, i: (j, 0)),  # weight tile
            ],
            out_specs=pl.BlockSpec((tm, tn), lambda j, i: (i, j)),
        ),
        compiler_params=compiler_params,
        cost_estimate=cost,
    )(h, w)


# --------------------------- GPT-2 forward (glue) -----------------------------
def _layer_norm(x, g, b, eps=1e-5):
    mu = jnp.mean(x, axis=-1, keepdims=True)
    var = jnp.mean((x - mu) ** 2, axis=-1, keepdims=True)
    return (x - mu) * jax.lax.rsqrt(var + eps) * g + b


def _gpt2_block(p, x, n_head):
    B, S, H = x.shape
    hd = H // n_head

    # --- causal self-attention ---
    a_in = _layer_norm(x, p["ln1_g"], p["ln1_b"])
    qkv = a_in @ p["w_qkv"] + p["b_qkv"]
    q, k, v = jnp.split(qkv, 3, axis=-1)

    def heads(t):
        return t.reshape(B, S, n_head, hd).transpose(0, 2, 1, 3)

    q, k, v = heads(q), heads(k), heads(v)
    att = jnp.einsum("bhqd,bhkd->bhqk", q, k) / math.sqrt(hd)
    mask = jnp.tril(jnp.ones((S, S), dtype=bool))
    neg = jnp.finfo(att.dtype).min            # dtype-aware large negative
    att = jnp.where(mask[None, None, :, :], att, neg)
    att = jax.nn.softmax(att, axis=-1)
    ctx = jnp.einsum("bhqk,bhkd->bhqd", att, v)
    ctx = ctx.transpose(0, 2, 1, 3).reshape(B, S, H)
    x = x + ctx @ p["w_proj"] + p["b_proj"]

    # --- MLP ---
    m_in = _layer_norm(x, p["ln2_g"], p["ln2_b"])
    hdn = jax.nn.gelu(m_in @ p["w_fc"] + p["b_fc"], approximate=True)
    x = x + hdn @ p["w_out"] + p["b_out"]
    return x


def gpt2_hidden(params, tokens, n_head):
    """Token ids [B, S] -> final hidden states [B, S, H] (eval mode)."""
    B, S = tokens.shape
    tok_emb = jnp.take(params["wte"], tokens, axis=0).astype(jnp.float32)
    h = tok_emb + params["wpe"][:S][None, :, :]
    for blk in params["blocks"]:
        h = _gpt2_block(blk, h, n_head)
    return _layer_norm(h, params["ln_f_g"], params["ln_f_b"])


def gpt2_lm_forward(params, tokens, n_head, out_dtype=jnp.bfloat16):
    """GPT2LM.forward: token ids [B, S] -> logits [B, S, V]."""
    h = gpt2_hidden(params, tokens, n_head)
    B, S, H = h.shape
    V = params["wte"].shape[0]
    logits = lm_head(h.reshape(B * S, H), params["wte"],
                     out_dtype=out_dtype)            # Pallas hot path
    return logits.reshape(B, S, V)


# ------------------------------- Param init -----------------------------------
def init_params(key, vocab, n_pos, H, n_layer, ffn_mult=4):
    ks = jax.random.split(key, 2 + n_layer)
    params = {
        # wte stored in bf16: cast hoisted out of the per-call LM-head hot
        # path (also halves the embedding-gather read).
        "wte": (jax.random.normal(ks[0], (vocab, H), jnp.float32) * 0.02
                ).astype(jnp.bfloat16),
        "wpe": jax.random.normal(ks[1], (n_pos, H), jnp.float32) * 0.01,
        "ln_f_g": jnp.ones((H,), jnp.float32),
        "ln_f_b": jnp.zeros((H,), jnp.float32),
        "blocks": [],
    }
    F = ffn_mult * H
    for layer in range(n_layer):
        kk = jax.random.split(ks[2 + layer], 4)
        params["blocks"].append({
            "ln1_g": jnp.ones((H,), jnp.float32),
            "ln1_b": jnp.zeros((H,), jnp.float32),
            "w_qkv": jax.random.normal(kk[0], (H, 3 * H), jnp.float32) * 0.02,
            "b_qkv": jnp.zeros((3 * H,), jnp.float32),
            "w_proj": jax.random.normal(kk[1], (H, H), jnp.float32) * 0.02,
            "b_proj": jnp.zeros((H,), jnp.float32),
            "ln2_g": jnp.ones((H,), jnp.float32),
            "ln2_b": jnp.zeros((H,), jnp.float32),
            "w_fc": jax.random.normal(kk[2], (H, F), jnp.float32) * 0.02,
            "b_fc": jnp.zeros((F,), jnp.float32),
            "w_out": jax.random.normal(kk[3], (F, H), jnp.float32) * 0.02,
            "b_out": jnp.zeros((H,), jnp.float32),
        })
    return params


# --------------------------------- Driver -------------------------------------
if __name__ == "__main__":
    VOCAB, HIDDEN, N_POS, N_LAYER, N_HEAD = 128, 32, 16, 2, 4
    BATCH, SEQ = 2, 8

    key = jax.random.PRNGKey(0)
    k_par, k_tok = jax.random.split(key)

    params = init_params(k_par, VOCAB, N_POS, HIDDEN, N_LAYER)
    tokens = jax.random.randint(k_tok, (BATCH, SEQ), 0, VOCAB, dtype=jnp.int32)

    fwd = jax.jit(lambda p, t: gpt2_lm_forward(p, t, n_head=N_HEAD))
    logits = jax.block_until_ready(fwd(params, tokens))
    assert logits.shape == (BATCH, SEQ, VOCAB)

    # Reference for the Pallas LM head: same bf16-rounded operands, f32 math.
    h_ref = gpt2_hidden(params, tokens, N_HEAD).reshape(BATCH * SEQ, HIDDEN)
    h_bf = h_ref.astype(jnp.bfloat16).astype(jnp.float32)
    w_bf = params["wte"].astype(jnp.float32)          # already bf16-rounded
    logits_ref = (h_bf @ w_bf.T).reshape(BATCH, SEQ, VOCAB)

    err = jnp.max(jnp.abs(logits.astype(jnp.float32) - logits_ref))
    assert jnp.allclose(logits.astype(jnp.float32), logits_ref,
                        atol=2e-2, rtol=5e-2), float(err)

    print("KERNEL_OK")
</pallas_src>

<mosaic_0001>
module attributes {stable_mosaic.version = 11 : i64} {
  func.func @_lm_head_kernel_resident(%arg0: i32, %arg1: i32, %arg2: memref<16x32xbf16, #tpu.memory_space<vmem>>, %arg3: memref<128x32xbf16, #tpu.memory_space<vmem>>, %arg4: memref<16x128xbf16, #tpu.memory_space<vmem>>) attributes {dimension_semantics = [#tpu.dimension_semantics<parallel>, #tpu.dimension_semantics<arbitrary>], iteration_bounds = array<i64: 1, 1>, scalar_prefetch = 0 : i64, scratch_operands = 0 : i64, tpu.core_type = #tpu.core_type<tc>, window_params = [{pipeline_mode = #tpu.pipeline_mode<synchronous>, transform_indices = @transform_0, window_bounds = array<i64: 16, 32>}, {transform_indices = @transform_1, window_bounds = array<i64: 128, 32>}, {transform_indices = @transform_2, window_bounds = array<i64: 16, 128>}]} {
    %c16_i32 = arith.constant 16 : i32
    %0 = arith.muli %arg1, %c16_i32 : i32
    %1 = tpu.assume_multiple %0, 16 : i32
    %2 = arith.index_cast %1 : i32 to index
    %c0 = arith.constant 0 : index
    %3 = vector.load %arg2[%2, %c0] : memref<16x32xbf16, #tpu.memory_space<vmem>>, vector<16x32xbf16>
    %c0_0 = arith.constant 0 : index
    %c0_1 = arith.constant 0 : index
    %4 = vector.load %arg3[%c0_0, %c0_1] : memref<128x32xbf16, #tpu.memory_space<vmem>>, vector<128x32xbf16>
    %cst = arith.constant dense<0.000000e+00> : vector<16x128xf32>
    %5 = tpu.matmul %3, %4, %cst {dimension_numbers = #tpu.dot_dimension_numbers<[1], [1], [0], [0], [0, 0, 1, 0], [], []>} : vector<16x32xbf16>, vector<128x32xbf16>, vector<16x128xf32> -> vector<16x128xf32>
    %6 = arith.truncf %5 : vector<16x128xf32> to vector<16x128xbf16>
    %c0_2 = arith.constant 0 : index
    %c0_3 = arith.constant 0 : index
    %7 = vector.load %arg4[%c0_2, %c0_3] : memref<16x128xbf16, #tpu.memory_space<vmem>>, vector<16x128xbf16>
    tpu.vector_store %arg4[%c0_2, %c0_3], %6 {strides = array<i32>} : memref<16x128xbf16, #tpu.memory_space<vmem>>, vector<16x128xbf16>,
    return
  }
  func.func @transform_0(%arg0: i32, %arg1: i32) -> (i32, i32) {
    %c0_i32 = arith.constant 0 : i32
    %c0_i32_0 = arith.constant 0 : i32
    %c0_i32_1 = arith.constant 0 : i32
    return %c0_i32, %c0_i32_0 : i32, i32
  }
  func.func @transform_1(%arg0: i32, %arg1: i32) -> (i32, i32) {
    %c0_i32 = arith.constant 0 : i32
    %c0_i32_0 = arith.constant 0 : i32
    return %arg0, %c0_i32 : i32, i32
  }
  func.func @transform_2(%arg0: i32, %arg1: i32) -> (i32, i32) {
    %c0_i32 = arith.constant 0 : i32
    return %arg1, %arg0 : i32, i32
  }
}

</mosaic_0001>

<llo_original>
// kernel: _lambda_.1
$region0: #{_lambda_.1}
  #allocation0 [shape = 'u32[]', space=smem, size = 0x4, offset = 0x4, fixed_abs, tag = 'smem constant byte address 0x4 - core index']
  #allocation1 [shape = 'u32[144,128]{1,0:T(1,128)}', space=vmem, size = 0x12000, scoped, tag = 'internal scratch']
  %s0 = inlined_call_operand.vmem [shape: bf16[16,32], index: 0, kind: input, shape index: {}]
  %s1 = inlined_call_operand.vmem [shape: bf16[128,32], index: 1, kind: input, shape index: {}]
  %s2 = inlined_call_operand.hbm [shape: bf16[16,128], index: 2, kind: output, shape index: {}]
  %s3 = sld [smem:[#allocation0]]
  $region18: #{_lambda_.1} parent=0
    _
  %s5 = ssub.s32 1, %s3
  %s6 = scalar_select 0, %s5, %s3
  $region1: #{_lambda_.1} parent=0
    #allocation2 [shape = 'u8[4096]{0}', space=vmem, size = 0x1000, scoped, tag = 'output window, operand 0, single buffered']
    #allocation3 [shape = 's32[1]{0}', space=sflag, size = 0x4, scoped, tag = 'scoped memory for _lambda_.1']
    %7 = vsyncpa [#allocation3], 0
    // Predicated region
    $region2: #{_lambda_.1} parent=1 // pred_check
      _
    $region3: #{_lambda_.1} parent=1 // pred_check_branch
      %9 = sbr.rel (0) target = $region5
    $region4: #{_lambda_.1} parent=1 // pred_region
      _
    $region5: #{_lambda_.1} parent=1 // pred_fallthru
      _
    // Predicated region
    $region6: #{_lambda_.1} parent=1 // pred_check
      _
    $region7: #{_lambda_.1} parent=1 // pred_check_branch
      %11 = sbr.rel (0) target = $region9
    $region8: #{_lambda_.1} parent=1 // pred_region
      _
    $region9: #{_lambda_.1} parent=1 // pred_fallthru
      _
    %s13 = smul.u32 0, 16
    %s14 = sshra.s32 %s13, 3
    %s15 = sand.u32 %s13, 7
    %s16 = smul.addr %s14, 4
    %s17 = scalar_lea.vmem %s0, %s16
    %v18 = vld [vmem:[%s17] sm:$0xf]
    %v19 = vld [vmem:[%s17 + $0x4] sm:$0xf]
    %v20 = vld [vmem:[%s1] sm:$0xf]
    %v21 = vld [vmem:[%s1 + $0x4] sm:$0xf]
    %v22 = vld [vmem:[%s1 + $0x8] sm:$0xf]
    %v23 = vld [vmem:[%s1 + $0xc] sm:$0xf]
    %v24 = vld [vmem:[%s1 + $0x10] sm:$0xf]
    %v25 = vld [vmem:[%s1 + $0x14] sm:$0xf]
    %v26 = vld [vmem:[%s1 + $0x18] sm:$0xf]
    %v27 = vld [vmem:[%s1 + $0x1c] sm:$0xf]
    %v28 = vld [vmem:[%s1 + $0x20] sm:$0xf]
    %v29 = vld [vmem:[%s1 + $0x24] sm:$0xf]
    %v30 = vld [vmem:[%s1 + $0x28] sm:$0xf]
    %v31 = vld [vmem:[%s1 + $0x2c] sm:$0xf]
    %v32 = vld [vmem:[%s1 + $0x30] sm:$0xf]
    %v33 = vld [vmem:[%s1 + $0x34] sm:$0xf]
    %v34 = vld [vmem:[%s1 + $0x38] sm:$0xf]
    %v35 = vld [vmem:[%s1 + $0x3c] sm:$0xf]
    %v38 = vunpack.c.l.b16 %v18
    %v39 = vunpack.c.l.b16 %v19
    %v40 = vpack.c.b16 %v39, %v38
    %v57 = vunpack.c.l.b16 %v20
    %v58 = vunpack.c.l.b16 %v21
    %v59 = vunpack.c.l.b16 %v22
    %v60 = vunpack.c.l.b16 %v23
    %v61 = vunpack.c.l.b16 %v24
    %v62 = vunpack.c.l.b16 %v25
    %v63 = vunpack.c.l.b16 %v26
    %v64 = vunpack.c.l.b16 %v27
    %v65 = vunpack.c.l.b16 %v28
    %v66 = vunpack.c.l.b16 %v29
    %v67 = vunpack.c.l.b16 %v30
    %v68 = vunpack.c.l.b16 %v31
    %v69 = vunpack.c.l.b16 %v32
    %v70 = vunpack.c.l.b16 %v33
    %v71 = vunpack.c.l.b16 %v34
    %v72 = vunpack.c.l.b16 %v35
    %v73 = vpack.c.b16 %v58, %v57
    %v74 = vpack.c.b16 %v60, %v59
    %v75 = vpack.c.b16 %v62, %v61
    %v76 = vpack.c.b16 %v64, %v63
    %v77 = vpack.c.b16 %v66, %v65
    %v78 = vpack.c.b16 %v68, %v67
    %v79 = vpack.c.b16 %v70, %v69
    %v80 = vpack.c.b16 %v72, %v71
    %vm81 = vcmask 261120
    %v83 = vsel %vm81, %v40, 0
    %v86 = vsel %vm81, %v73, 0
    %v89 = vsel %vm81, %v74, 0
    %v92 = vsel %vm81, %v75, 0
    %v95 = vsel %vm81, %v76, 0
    %v98 = vsel %vm81, %v77, 0
    %v101 = vsel %vm81, %v78, 0
    %v104 = vsel %vm81, %v79, 0
    %v107 = vsel %vm81, %v80, 0
    %109 = vmatprep.subr.bf16.mxu0 0
    %110 = vmatpush1.bf16.xpose.msra.mxu0 %v86
    %111 = vmatprep.subr.bf16.mxu0 0
    %112 = vmatpush1.bf16.xpose.msra.mxu0 %v89
    %113 = vmatprep.subr.bf16.mxu0 0
    %114 = vmatpush1.bf16.xpose.msra.mxu0 %v92
    %115 = vmatprep.subr.bf16.mxu0 0
    %116 = vmatpush1.bf16.xpose.msra.mxu0 %v95
    %117 = vmatprep.subr.bf16.mxu0 0
    %118 = vmatpush1.bf16.xpose.msra.mxu0 %v98
    %119 = vmatprep.subr.bf16.mxu0 0
    %120 = vmatpush1.bf16.xpose.msra.mxu0 %v101
    %121 = vmatprep.subr.bf16.mxu0 0
    %122 = vmatpush1.bf16.xpose.msra.mxu0 %v104
    %123 = vmatprep.subr.bf16.mxu0 0
    %124 = vmatpush1.bf16.xpose.msra.mxu0 %v107
    %125 = vmatprep.subr.bf16.mxu0 0
    %126 = vmatpush1.bf16.xpose.msra.mxu0 0
    %127 = vmatprep.subr.bf16.mxu0 0
    %128 = vmatpush1.bf16.xpose.msra.mxu0 0
    %129 = vmatprep.subr.bf16.mxu0 0
    %130 = vmatpush1.bf16.xpose.msra.mxu0 0
    %131 = vmatprep.subr.bf16.mxu0 0
    %132 = vmatpush1.bf16.xpose.msra.mxu0 0
    %133 = vmatprep.subr.bf16.mxu0 0
    %134 = vmatpush1.bf16.xpose.msra.mxu0 0
    %135 = vmatprep.subr.bf16.mxu0 0
    %136 = vmatpush1.bf16.xpose.msra.mxu0 0
    %137 = vmatprep.subr.bf16.mxu0 0
    %138 = vmatpush1.bf16.xpose.msra.mxu0 0
    %139 = vmatprep.subr.bf16.mxu0 0
    %140 = vmatpush1.bf16.xpose.msra.mxu0 0
    %141 = vmatprep.mubr.bf16.mxu0 0
    %142 = vmatmul.mubr.bf16.gmra.mrb[0].mxu0 %v83
    %v143 = vpop.f32.mrb[0].mxu0
    %v144 = vadd.f32 0.0, %v143
    %v145 = vpop.f32.mrb[0].mxu0
    %v146 = vpop.f32.mrb[0].mxu0
    %v147 = vadd.f32 0.0, %v146
    %v148 = vpop.f32.mrb[0].mxu0
    %149 = vdwg.mxu0
    %v150 = vpack.c.bf16 %v147, %v144
    %v152 = vunpack.c.l.b16 %v150
    %v153 = vunpack.c.h.b16 %v150
    %v154 = vpack.c.b16 %v152, %v152
    %v155 = vpack.c.b16 %v153, %v153
    %158 = vst [vmem:[#allocation2] sm:$0xf] %v154
    %159 = vst [vmem:[#allocation2 + $0x4] sm:$0xf] %v155
    // Predicated region
    $region10: #{_lambda_.1} parent=1 // pred_check
      _
    $region11: #{_lambda_.1} parent=1 // pred_check_branch
      %161 = sbr.rel (0) target = $region13
    $region12: #{_lambda_.1} parent=1 // pred_region
      %s163 = ssub.s32 128, 128
      %164 = vsyncadd [#allocation3], %s163
      %s165 = sshll.u32 [#allocation2], 4
      %s166 = int_to_ptr.vmem [resolvable:$true] %s165
      %171 = dma.vmem_to_hbm [thread:$0]  %s166, 128, %s2, [#allocation3], 64, 64, 4
    $region13: #{_lambda_.1} parent=1 // pred_fallthru
      _
    // Predicated region
    $region14: #{_lambda_.1} parent=1 // pred_check
      _
    $region15: #{_lambda_.1} parent=1 // pred_check_branch
      %173 = sbr.rel (0) target = $region17
    $region16: #{_lambda_.1} parent=1 // pred_region
      %174 = dma.done [#allocation3], 128
    $region17: #{_lambda_.1} parent=1 // pred_fallthru
      _
    %175 = vsyncpa [#allocation3], 1

</llo_original>
